<compile_context>
chip_gen: v5e
topology: v5e:2x2
jax: 0.10.0
libtpu: 0.0.40
codegen_flags: <defaults>
</compile_context>

<pallas_src>
import functools

import jax
import jax.numpy as jnp
from jax.experimental import pallas as pl
from jax.experimental.pallas import tpu as pltpu


def _round_up(x, m):
    return ((x + m - 1) // m) * m


def _occlu_mlp_kernel(x_ref, w1t_ref, b1_ref, w2_ref, b2_ref, o_ref, *,
                      out_dim, mm_dtype):
    # x_ref:   (tn, in_dim)      streamed, natural layout (last tile may be partial)
    # w1t_ref: (hidden, in_dim)  resident
    # b1_ref:  (hidden, 1)       resident
    # w2_ref:  (hidden, out_dim) resident
    # b2_ref:  (out_dim, 1)      resident
    # o_ref:   (out_dim, tn)     lane-dense output slab

    # Layer 1 in transposed space: hT[h, n] = sum_k W1[k, h] * x[n, k].
    # NT dot_general (contract the minor dim of both operands) -- same pattern as
    # q @ k^T in flash attention, so the MXU handles the orientation itself.
    hT = jax.lax.dot_general(
        w1t_ref[...].astype(mm_dtype),
        x_ref[...].astype(mm_dtype),
        dimension_numbers=(((1,), (1,)), ((), ())),
        preferred_element_type=jnp.float32,
    )                                                      # (hidden, tn)
    hT = jnp.maximum(hT + b1_ref[...], 0.0)                # bias + ReLU

    if out_dim == 1:
        # Second Linear collapses to a weighted sublane reduction (VPU/XLU),
        # keeping the MXU free instead of streaming all of h for a single row.
        y = jnp.sum(hT * w2_ref[...], axis=0, keepdims=True)        # (1, tn)
    else:
        # General out_dim fallback (not exercised by the default module config).
        y = jax.lax.dot_general(
            w2_ref[...], hT,
            dimension_numbers=(((0,), (0,)), ((), ())),
            preferred_element_type=jnp.float32)                      # (out_dim, tn)
    y = y + b2_ref[...]

    # Softplus, PyTorch semantics (beta=1, threshold=20 -> identity above 20).
    sp = jnp.log1p(jnp.exp(jnp.minimum(y, 20.0)))
    o_ref[...] = jnp.where(y > 20.0, y, sp).astype(o_ref.dtype)


def _vmem_limit_bytes(tn, in_dim, hidden, out_dim):
    f32 = 4
    x_buf = 2 * tn * _round_up(in_dim, 128) * f32      # double-buffered x tile (lane-padded)
    o_buf = 2 * _round_up(out_dim, 8) * tn * f32       # double-buffered output slab
    h_tmp = _round_up(hidden, 8) * tn * (f32 + 2)      # f32 hT + bf16 temporaries
    w_res = 2 * f32 * (_round_up(hidden, 8) * _round_up(in_dim, 128)
                       + 3 * _round_up(hidden, 8) * 128)
    need = x_buf + o_buf + h_tmp + w_res + (6 << 20)   # + compiler-scratch headroom
    try:
        phys = getattr(pltpu.get_tpu_info(), "vmem_capacity_bytes", 64 << 20)
    except Exception:
        phys = 64 << 20                                # conservative: v7x per-core VMEM
    return int(min(max(need, 16 << 20), (phys * 3) // 4))


def occlu_mlp(x, w1, b1, w2, b2, *, tile_n=16384, matmul_dtype=jnp.bfloat16):
    """OccluMLP forward.  x: (..., in_dim) -> (..., out_dim)."""
    in_dim = x.shape[-1]
    hidden = w1.shape[1]
    out_dim = w2.shape[1]
    assert w1.shape == (in_dim, hidden) and b1.shape == (hidden,)
    assert w2.shape == (hidden, out_dim) and b2.shape == (out_dim,)

    lead = x.shape[:-1]
    x2 = x.reshape(-1, in_dim)                # contiguous reshape: no HBM copy
    n = x2.shape[0]

    # Batch tile: multiple of 128 lanes, clamped to the 128-rounded batch.
    # Sweep tile_n in 8192..32768; bigger tiles amortize per-step overhead.
    tn = max(128, min(_round_up(tile_n, 128), _round_up(n, 128)))
    grid = (pl.cdiv(n, tn),)                  # last tile may be partial -> no host pad

    w1t = w1.T                                # (hidden, in_dim) - tiny, VMEM-resident
    b1c = b1.reshape(hidden, 1)
    b2c = b2.reshape(out_dim, 1)

    kernel = functools.partial(_occlu_mlp_kernel, out_dim=out_dim,
                               mm_dtype=matmul_dtype)

    yT = pl.pallas_call(
        kernel,
        out_shape=jax.ShapeDtypeStruct((out_dim, n), x2.dtype),
        grid_spec=pltpu.PrefetchScalarGridSpec(
            num_scalar_prefetch=0,
            grid=grid,
            in_specs=[
                pl.BlockSpec((tn, in_dim), lambda i: (i, 0)),        # streamed x
                pl.BlockSpec((hidden, in_dim), lambda i: (0, 0)),    # resident W1^T
                pl.BlockSpec((hidden, 1), lambda i: (0, 0)),         # resident b1
                pl.BlockSpec((hidden, out_dim), lambda i: (0, 0)),   # resident W2
                pl.BlockSpec((out_dim, 1), lambda i: (0, 0)),        # resident b2
            ],
            out_specs=pl.BlockSpec((out_dim, tn), lambda i: (0, i)),
        ),
        compiler_params=pltpu.CompilerParams(
            dimension_semantics=("parallel",),
            vmem_limit_bytes=_vmem_limit_bytes(tn, in_dim, hidden, out_dim),
        ),
    )(x2, w1t, b1c, w2, b2c)

    return yT.T.reshape(*lead, out_dim)       # (..., out_dim); tiny transpose


def _reference(x, w1, b1, w2, b2):
    h = jnp.maximum(x @ w1 + b1, 0.0)
    y = h @ w2 + b2
    return jnp.where(y > 20.0, y, jnp.log1p(jnp.exp(jnp.minimum(y, 20.0))))


if __name__ == "__main__":
    in_dim, hidden_dim, out_dim = 32, 32, 1
    N = 300  # deliberately not a multiple of 128: exercises partial trailing tiles

    key = jax.random.PRNGKey(0)
    k_x, k_w1, k_b1, k_w2, k_b2 = jax.random.split(key, 5)

    x = jax.random.normal(k_x, (N, in_dim), dtype=jnp.float32)
    lim1 = 1.0 / jnp.sqrt(in_dim)
    w1 = jax.random.uniform(k_w1, (in_dim, hidden_dim), jnp.float32, -lim1, lim1)
    b1 = jax.random.uniform(k_b1, (hidden_dim,), jnp.float32, -lim1, lim1)
    lim2 = 1.0 / jnp.sqrt(hidden_dim)
    w2 = jax.random.uniform(k_w2, (hidden_dim, out_dim), jnp.float32, -lim2, lim2)
    b2 = jax.random.uniform(k_b2, (out_dim,), jnp.float32, -lim2, lim2)

    ref = _reference(x, w1, b1, w2, b2)

    # Exact-precision path, small tile -> multi-step grid with a partial last tile.
    out_f32 = occlu_mlp(x, w1, b1, w2, b2, tile_n=128, matmul_dtype=jnp.float32)
    jax.block_until_ready(out_f32)
    assert out_f32.shape == (N, out_dim)
    assert jnp.allclose(out_f32, ref, atol=1e-5, rtol=1e-5)

    # Default fast path: bf16 MXU operands (f32 accumulation), large tile clamped
    # to the batch -> looser tolerance due to bf16 matmul rounding.
    out_fast = occlu_mlp(x, w1, b1, w2, b2)
    jax.block_until_ready(out_fast)
    assert out_fast.shape == (N, out_dim)
    assert jnp.allclose(out_fast, ref, atol=1e-2, rtol=1e-2)

    print("KERNEL_OK")
</pallas_src>

<mosaic_0001>
module attributes {stable_mosaic.version = 11 : i64} {
  func.func @_occlu_mlp_kernel(%arg0: i32, %arg1: memref<128x32xf32, #tpu.memory_space<vmem>>, %arg2: memref<32x32xf32, #tpu.memory_space<vmem>>, %arg3: memref<32x1xf32, #tpu.memory_space<vmem>>, %arg4: memref<32x1xf32, #tpu.memory_space<vmem>>, %arg5: memref<1x1xf32, #tpu.memory_space<vmem>>, %arg6: memref<1x128xf32, #tpu.memory_space<vmem>>) attributes {dimension_semantics = [#tpu.dimension_semantics<parallel>], iteration_bounds = array<i64: 3>, scalar_prefetch = 0 : i64, scratch_operands = 0 : i64, tpu.core_type = #tpu.core_type<tc>, window_params = [{transform_indices = @transform_0, window_bounds = array<i64: 128, 32>}, {pipeline_mode = #tpu.pipeline_mode<synchronous>, transform_indices = @transform_1, window_bounds = array<i64: 32, 32>}, {pipeline_mode = #tpu.pipeline_mode<synchronous>, transform_indices = @transform_2, window_bounds = array<i64: 32, 1>}, {pipeline_mode = #tpu.pipeline_mode<synchronous>, transform_indices = @transform_3, window_bounds = array<i64: 32, 1>}, {pipeline_mode = #tpu.pipeline_mode<synchronous>, transform_indices = @transform_4, window_bounds = array<i64: 1, 1>}, {transform_indices = @transform_5, window_bounds = array<i64: 1, 128>}]} {
    %c0 = arith.constant 0 : index
    %c0_0 = arith.constant 0 : index
    %0 = vector.load %arg2[%c0, %c0_0] : memref<32x32xf32, #tpu.memory_space<vmem>>, vector<32x32xf32>
    %c0_1 = arith.constant 0 : index
    %c0_2 = arith.constant 0 : index
    %1 = vector.load %arg1[%c0_1, %c0_2] : memref<128x32xf32, #tpu.memory_space<vmem>>, vector<128x32xf32>
    %cst = arith.constant dense<0.000000e+00> : vector<32x128xf32>
    %2 = tpu.matmul %0, %1, %cst {dimension_numbers = #tpu.dot_dimension_numbers<[1], [1], [0], [0], [0, 0, 1, 0], [], []>} : vector<32x32xf32>, vector<128x32xf32>, vector<32x128xf32> -> vector<32x128xf32>
    %c0_3 = arith.constant 0 : index
    %c0_4 = arith.constant 0 : index
    %3 = vector.load %arg3[%c0_3, %c0_4] : memref<32x1xf32, #tpu.memory_space<vmem>>, vector<32x1xf32>
    %4 = vector.broadcast %3 : vector<32x1xf32> to vector<32x128xf32>
    %5 = arith.addf %2, %4 : vector<32x128xf32>
    %cst_5 = arith.constant 0.000000e+00 : f32
    %6 = vector.broadcast %cst_5 : f32 to vector<32x128xf32>
    %7 = arith.maximumf %5, %6 : vector<32x128xf32>
    %c0_6 = arith.constant 0 : index
    %c0_7 = arith.constant 0 : index
    %8 = vector.load %arg4[%c0_6, %c0_7] : memref<32x1xf32, #tpu.memory_space<vmem>>, vector<32x1xf32>
    %9 = vector.broadcast %8 : vector<32x1xf32> to vector<32x128xf32>
    %10 = arith.mulf %7, %9 : vector<32x128xf32>
    %cst_8 = arith.constant dense<0.000000e+00> : vector<128xf32>
    %11 = vector.multi_reduction <add>, %10, %cst_8 [0] : vector<32x128xf32> to vector<128xf32>
    %12 = vector.shape_cast %11 : vector<128xf32> to vector<1x128xf32>
    %c0_9 = arith.constant 0 : index
    %c0_10 = arith.constant 0 : index
    %13 = vector.load %arg5[%c0_9, %c0_10] : memref<1x1xf32, #tpu.memory_space<vmem>>, vector<1x1xf32>
    %14 = vector.broadcast %13 : vector<1x1xf32> to vector<1x128xf32>
    %15 = arith.addf %12, %14 : vector<1x128xf32>
    %cst_11 = arith.constant 2.000000e+01 : f32
    %16 = vector.broadcast %cst_11 : f32 to vector<1x128xf32>
    %17 = arith.minimumf %15, %16 : vector<1x128xf32>
    %18 = math.exp %17 : vector<1x128xf32>
    %19 = math.log1p %18 : vector<1x128xf32>
    %cst_12 = arith.constant 2.000000e+01 : f32
    %20 = vector.broadcast %cst_12 : f32 to vector<1x128xf32>
    %21 = arith.cmpf ogt, %15, %20 : vector<1x128xf32>
    %22 = arith.select %21, %15, %19 : vector<1x128xi1>, vector<1x128xf32>
    %c0_13 = arith.constant 0 : index
    %c0_14 = arith.constant 0 : index
    %23 = vector.load %arg6[%c0_13, %c0_14] : memref<1x128xf32, #tpu.memory_space<vmem>>, vector<1x128xf32>
    tpu.vector_store %arg6[%c0_13, %c0_14], %22 {strides = array<i32>} : memref<1x128xf32, #tpu.memory_space<vmem>>, vector<1x128xf32>,
    return
  }
  func.func @transform_0(%arg0: i32) -> (i32, i32) {
    %c0_i32 = arith.constant 0 : i32
    %c0_i32_0 = arith.constant 0 : i32
    return %arg0, %c0_i32 : i32, i32
  }
  func.func @transform_1(%arg0: i32) -> (i32, i32) {
    %c0_i32 = arith.constant 0 : i32
    %c0_i32_0 = arith.constant 0 : i32
    %c0_i32_1 = arith.constant 0 : i32
    return %c0_i32, %c0_i32_0 : i32, i32
  }
  func.func @transform_2(%arg0: i32) -> (i32, i32) {
    %c0_i32 = arith.constant 0 : i32
    %c0_i32_0 = arith.constant 0 : i32
    %c0_i32_1 = arith.constant 0 : i32
    return %c0_i32, %c0_i32_0 : i32, i32
  }
  func.func @transform_3(%arg0: i32) -> (i32, i32) {
    %c0_i32 = arith.constant 0 : i32
    %c0_i32_0 = arith.constant 0 : i32
    %c0_i32_1 = arith.constant 0 : i32
    return %c0_i32, %c0_i32_0 : i32, i32
  }
  func.func @transform_4(%arg0: i32) -> (i32, i32) {
    %c0_i32 = arith.constant 0 : i32
    %c0_i32_0 = arith.constant 0 : i32
    %c0_i32_1 = arith.constant 0 : i32
    return %c0_i32, %c0_i32_0 : i32, i32
  }
  func.func @transform_5(%arg0: i32) -> (i32, i32) {
    %c0_i32 = arith.constant 0 : i32
    %c0_i32_0 = arith.constant 0 : i32
    return %c0_i32, %arg0 : i32, i32
  }
}

</mosaic_0001>

<llo_original>
// kernel: tpu_custom_call.1
$region0: #{tpu_custom_call.1}
  #allocation0 [shape = 'u32[]', space=smem, size = 0x4, offset = 0x4, fixed_abs, tag = 'smem constant byte address 0x4 - core index']
  #allocation1 [shape = 'u32[72,128]{1,0:T(1,128)}', space=vmem, size = 0x9000, scoped, tag = 'internal scratch']
  #allocation2 [shape = 'f32[1,1]{1,0:T(1,128)S(1)}', space=vmem, size = 0x200, scoped, tag = 'scoped memory for tpu_custom_call.1']
  %s0 = inlined_call_operand.vmem [shape: f32[300,32], index: 0, kind: input, shape index: {}]
  %s1 = inlined_call_operand.vmem [shape: f32[32,32], index: 1, kind: input, shape index: {}]
  %s2 = inlined_call_operand.vmem [shape: f32[32,1], index: 2, kind: input, shape index: {}]
  %s3 = inlined_call_operand.vmem [shape: f32[32,1], index: 3, kind: input, shape index: {}]
  %s4 = inlined_call_operand.<no memory space> [shape: f32[1,1], index: 4, kind: input, shape index: {}]
  %s5 = inlined_call_operand.hbm [shape: f32[1,300], index: 5, kind: output, shape index: {}]
  %s6 = sld [smem:[#allocation0]]
  $region53: #{tpu_custom_call.1} parent=0
    _
  %s8 = ssub.s32 1, %s6
  %s9 = scalar_select 0, %s8, %s6
  %v10 = vstv %s4
  %11 = vst [vmem:[#allocation2] sm:$0x1] %v10
  $region1: #{tpu_custom_call.1} parent=0
    #allocation3 [shape = 'u8[1024]{0}', space=vmem, size = 0x400, scoped, tag = 'output window, operand 0']
    #allocation4 [shape = 's32[2]{0}', space=sflag, size = 0x8, scoped, tag = 'scoped memory for tpu_custom_call.1']
    %12 = vsyncpa [#allocation4], 0
    %s13 = scalar_lea.sflag [#allocation4], 1
    %14 = vsyncpa %s13, 0
    loop: start=0, step=1, limit=5
    $region2: #{tpu_custom_call.1} parent=1 // loop_pre_header
      _
    $region3: #{tpu_custom_call.1} parent=1 // loop_header
      %s16 = sphi 0, %s20
      %p17 = scmp.ge.s32.totalorder %s16, 5
      %s26 = sphi 0, %s28
      %s29 = sphi 0, %s26
      %s30 = sphi 0, %s29
      %s46 = sphi 0, %s30
      %s50 = sphi 0, %s50
      %s52 = sphi 0, %s50
      %s53 = sphi 0, %s52
      %s67 = sphi 0, %s53
      %s71 = sphi 0, %s71
      %s73 = sphi 0, %s71
      %s74 = sphi 0, %s73
      %s88 = sphi 0, %s74
      %s92 = sphi 0, %s92
      %s94 = sphi 0, %s92
      %s95 = sphi 0, %s94
      %s109 = sphi 0, %s95
      %s113 = sphi 0, %s113
      %s115 = sphi 0, %s113
      %s116 = sphi 0, %s115
      %s130 = sphi 0, %s116
      %s136 = sphi 0, %s138
      %s139 = sphi 0, %s136
      %s140 = sphi 0, %s139
      %s156 = sphi 0, %s140
    $region4: #{tpu_custom_call.1} parent=1 // loop_header_branch
      %19 = sbr.rel (%p17) target = $region8
    $region5: #{tpu_custom_call.1} parent=1 // loop_body
      %s21 = ssub.s32 %s16, 1
      %s22 = ssub.s32 %s16, 2
      %s23 = sadd.s32 %s16, 1
      %s24 = ssub.s32 %s16, %s23
      %p25 = scmp.eq.s32.totalorder %s24, 0
      %s27 = sadd.s32 %s26, 1
      %s28 = scalar_select %p25, %s26, %s27
      %p31 = pneg %p25
      %p32 = scmp.eq.s32.totalorder %s16, 2
      %p33 = por %p31, %p32
      %p34 = scmp.ne.s32.totalorder %s26, %s29
      %p35 = scmp.eq.s32.totalorder %s16, 0
      %p36 = por %p34, %p35
      %p37 = scmp.ne.s32.totalorder %s26, %s29
      %p38 = scmp.eq.s32.totalorder %s21, 2
      %p39 = por %p37, %p38
      %p40 = scmp.ne.s32.totalorder %s29, %s30
      %p41 = scmp.eq.s32.totalorder %s21, 0
      %p42 = por %p40, %p41
      %p43 = scmp.ne.s32.totalorder %s29, %s30
      %p44 = scmp.eq.s32.totalorder %s22, 2
      %p45 = por %p43, %p44
      %p47 = scmp.ne.s32.totalorder %s30, %s46
      %p48 = scmp.eq.s32.totalorder %s22, 0
      %p49 = por %p47, %p48
      %s51 = sadd.s32 %s50, 1
      %p54 = scmp.eq.s32.totalorder %s16, 2
      %p55 = scmp.ne.s32.totalorder %s50, %s52
      %p56 = scmp.eq.s32.totalorder %s16, 0
      %p57 = por %p55, %p56
      %p58 = scmp.ne.s32.totalorder %s50, %s52
      %p59 = scmp.eq.s32.totalorder %s21, 2
      %p60 = por %p58, %p59
      %p61 = scmp.ne.s32.totalorder %s52, %s53
      %p62 = scmp.eq.s32.totalorder %s21, 0
      %p63 = por %p61, %p62
      %p64 = scmp.ne.s32.totalorder %s52, %s53
      %p65 = scmp.eq.s32.totalorder %s22, 2
      %p66 = por %p64, %p65
      %p68 = scmp.ne.s32.totalorder %s53, %s67
      %p69 = scmp.eq.s32.totalorder %s22, 0
      %p70 = por %p68, %p69
      %s72 = sadd.s32 %s71, 1
      %p75 = scmp.eq.s32.totalorder %s16, 2
      %p76 = scmp.ne.s32.totalorder %s71, %s73
      %p77 = scmp.eq.s32.totalorder %s16, 0
      %p78 = por %p76, %p77
      %p79 = scmp.ne.s32.totalorder %s71, %s73
      %p80 = scmp.eq.s32.totalorder %s21, 2
      %p81 = por %p79, %p80
      %p82 = scmp.ne.s32.totalorder %s73, %s74
      %p83 = scmp.eq.s32.totalorder %s21, 0
      %p84 = por %p82, %p83
      %p85 = scmp.ne.s32.totalorder %s73, %s74
      %p86 = scmp.eq.s32.totalorder %s22, 2
      %p87 = por %p85, %p86
      %p89 = scmp.ne.s32.totalorder %s74, %s88
      %p90 = scmp.eq.s32.totalorder %s22, 0
      %p91 = por %p89, %p90
      %s93 = sadd.s32 %s92, 1
      %p96 = scmp.eq.s32.totalorder %s16, 2
      %p97 = scmp.ne.s32.totalorder %s92, %s94
      %p98 = scmp.eq.s32.totalorder %s16, 0
      %p99 = por %p97, %p98
      %p100 = scmp.ne.s32.totalorder %s92, %s94
      %p101 = scmp.eq.s32.totalorder %s21, 2
      %p102 = por %p100, %p101
      %p103 = scmp.ne.s32.totalorder %s94, %s95
      %p104 = scmp.eq.s32.totalorder %s21, 0
      %p105 = por %p103, %p104
      %p106 = scmp.ne.s32.totalorder %s94, %s95
      %p107 = scmp.eq.s32.totalorder %s22, 2
      %p108 = por %p106, %p107
      %p110 = scmp.ne.s32.totalorder %s95, %s109
      %p111 = scmp.eq.s32.totalorder %s22, 0
      %p112 = por %p110, %p111
      %s114 = sadd.s32 %s113, 1
      %p117 = scmp.eq.s32.totalorder %s16, 2
      %p118 = scmp.ne.s32.totalorder %s113, %s115
      %p119 = scmp.eq.s32.totalorder %s16, 0
      %p120 = por %p118, %p119
      %p121 = scmp.ne.s32.totalorder %s113, %s115
      %p122 = scmp.eq.s32.totalorder %s21, 2
      %p123 = por %p121, %p122
      %p124 = scmp.ne.s32.totalorder %s115, %s116
      %p125 = scmp.eq.s32.totalorder %s21, 0
      %p126 = por %p124, %p125
      %p127 = scmp.ne.s32.totalorder %s115, %s116
      %p128 = scmp.eq.s32.totalorder %s22, 2
      %p129 = por %p127, %p128
      %p131 = scmp.ne.s32.totalorder %s116, %s130
      %p132 = scmp.eq.s32.totalorder %s22, 0
      %p133 = por %p131, %p132
      %s134 = ssub.s32 %s16, %s23
      %p135 = scmp.eq.s32.totalorder %s134, 0
      %s137 = sadd.s32 %s136, 1
      %s138 = scalar_select %p135, %s136, %s137
      %p141 = pneg %p135
      %p142 = scmp.eq.s32.totalorder %s16, 2
      %p143 = por %p141, %p142
      %p144 = scmp.ne.s32.totalorder %s136, %s139
      %p145 = scmp.eq.s32.totalorder %s16, 0
      %p146 = por %p144, %p145
      %p147 = scmp.ne.s32.totalorder %s136, %s139
      %p148 = scmp.eq.s32.totalorder %s21, 2
      %p149 = por %p147, %p148
      %p150 = scmp.ne.s32.totalorder %s139, %s140
      %p151 = scmp.eq.s32.totalorder %s21, 0
      %p152 = por %p150, %p151
      %p153 = scmp.ne.s32.totalorder %s139, %s140
      %p154 = scmp.eq.s32.totalorder %s22, 2
      %p155 = por %p153, %p154
      %p157 = scmp.ne.s32.totalorder %s140, %s156
      %p158 = scmp.eq.s32.totalorder %s22, 0
      %p159 = por %p157, %p158
      %p160 = scmp.le.s32.totalorder 1, %s16
      %p161 = scmp.lt.s32.totalorder %s16, 4
      %p162 = pnand %p160, %p161
      %p163 = pneg %p162
      // Predicated region
      $region9: #{tpu_custom_call.1} parent=5 // pred_check
        _
      $region10: #{tpu_custom_call.1} parent=5 // pred_check_branch
        %165 = sbr.rel (%p162) target = $region12
      $region11: #{tpu_custom_call.1} parent=5 // pred_region
        %s166 = ssub.s32 %s16, 1
        // Predicated region
        $region13: #{tpu_custom_call.1} parent=11 // pred_check
          %p167 = pneg %p63
        $region14: #{tpu_custom_call.1} parent=11 // pred_check_branch
          %169 = sbr.rel (%p167) target = $region16
        $region15: #{tpu_custom_call.1} parent=11 // pred_region
          _
        $region16: #{tpu_custom_call.1} parent=11 // pred_fallthru
          _
        // Predicated region
        $region17: #{tpu_custom_call.1} parent=11 // pred_check
          %p170 = pneg %p84
        $region18: #{tpu_custom_call.1} parent=11 // pred_check_branch
          %172 = sbr.rel (%p170) target = $region20
        $region19: #{tpu_custom_call.1} parent=11 // pred_region
          _
        $region20: #{tpu_custom_call.1} parent=11 // pred_fallthru
          _
        // Predicated region
        $region21: #{tpu_custom_call.1} parent=11 // pred_check
          %p173 = pneg %p105
        $region22: #{tpu_custom_call.1} parent=11 // pred_check_branch
          %175 = sbr.rel (%p173) target = $region24
        $region23: #{tpu_custom_call.1} parent=11 // pred_region
          _
        $region24: #{tpu_custom_call.1} parent=11 // pred_fallthru
          _
        // Predicated region
        $region25: #{tpu_custom_call.1} parent=11 // pred_check
          %p176 = pneg %p126
        $region26: #{tpu_custom_call.1} parent=11 // pred_check_branch
          %178 = sbr.rel (%p176) target = $region28
        $region27: #{tpu_custom_call.1} parent=11 // pred_region
          _
        $region28: #{tpu_custom_call.1} parent=11 // pred_fallthru
          _
      $region12: #{tpu_custom_call.1} parent=5 // pred_fallthru
        _
      %p179 = scmp.lt.s32.totalorder %s16, 3
      // Predicated region
      $region29: #{tpu_custom_call.1} parent=5 // pred_check
        %p180 = pneg %p179
      $region30: #{tpu_custom_call.1} parent=5 // pred_check_branch
        %182 = sbr.rel (%p180) target = $region32
      $region31: #{tpu_custom_call.1} parent=5 // pred_region
        // Predicated region
        $region33: #{tpu_custom_call.1} parent=31 // pred_check
          %p183 = pneg %p36
        $region34: #{tpu_custom_call.1} parent=31 // pred_check_branch
          %185 = sbr.rel (%p183) target = $region36
        $region35: #{tpu_custom_call.1} parent=31 // pred_region
          %s186 = smul.u32 16, %s16
          %s187 = ssub.s32 38, %s186
          %p188 = scmp.lt.s32.totalorder %s187, 16
          %s189 = scalar_select %p188, %s187, 16
          %s190 = smul.u32 8, %s189
          %p191 = scmp.lt.s32.totalorder %s186, 37
          %s192 = scalar_select %p191, %s186, 37
          %s193 = smul.addr %s192, 8
          %s194 = scalar_lea.vmem %s0, %s193
          %s195 = smul.u32 16, %s16
          %s196 = ssub.s32 38, %s195
          %p197 = scmp.lt.s32.totalorder %s196, 16
          %s198 = scalar_select %p197, %s196, 16
          %s199 = smul.u32 8, %s198
        $region36: #{tpu_custom_call.1} parent=31 // pred_fallthru
          _
      $region32: #{tpu_custom_call.1} parent=5 // pred_fallthru
        _
      %p200 = scmp.le.s32.totalorder 1, %s16
      %p201 = scmp.lt.s32.totalorder %s16, 4
      %p202 = pnand %p200, %p201
      %p203 = pneg %p202
      // Predicated region
      $region37: #{tpu_custom_call.1} parent=5 // pred_check
        _
      $region38: #{tpu_custom_call.1} parent=5 // pred_check_branch
        %205 = sbr.rel (%p202) target = $region40
      $region39: #{tpu_custom_call.1} parent=5 // pred_region
        %s206 = ssub.s32 %s16, 1
        %s207 = smul.u32 16, %s21
        %s208 = ssub.s32 38, %s207
        %p209 = scmp.lt.s32.totalorder %s208, 16
        %s210 = scalar_select %p209, %s208, 16
        %s211 = smul.u32 8, %s210
        %p212 = scmp.lt.s32.totalorder %s207, 37
        %s213 = scalar_select %p212, %s207, 37
        %s214 = smul.addr %s213, 8
        %s215 = scalar_lea.vmem %s0, %s214
        %p216 = pneg %p42
        %p217 = pneg %p39
        %p218 = pneg %p63
        %p219 = pneg %p60
        %p220 = pneg %p84
        %p221 = pneg %p81
        %p222 = pneg %p105
        %p223 = pneg %p102
        %p224 = pneg %p126
        %p225 = pneg %p123
        %p226 = pneg %p152
        %p227 = pneg %p149
        %s228 = sand.u32 %s139, 1
        %s229 = scalar_lea.sflag [#allocation4], %s228
        %s230 = sand.u32 %s139, 1
        %s231 = scalar_lea.vmem [#allocation3], %s230
        %s232 = smul.u32 16, %s21
        %s233 = ssub.s32 38, %s232
        %p234 = scmp.lt.s32.totalorder %s233, 16
        %s235 = scalar_select %p234, %s233, 16
        %s236 = smul.u32 8, %s235
        %p237 = scmp.lt.s32.totalorder %s232, 37
        %s238 = scalar_select %p237, %s232, 37
        %s239 = smul.addr %s238, 8
        %s240 = scalar_lea.vmem %s0, %s239
        %s241 = smul.u32 16, %s21
        %s242 = ssub.s32 38, %s241
        %p243 = scmp.lt.s32.totalorder %s242, 16
        %s244 = scalar_select %p243, %s242, 16
        %s245 = smul.u32 8, %s244
        %v246 = vld [vmem:[%s1] sm:$0xff]
        %v247 = vld [vmem:[%s1 + $0x8] sm:$0xff]
        %v248 = vld [vmem:[%s1 + $0x10] sm:$0xff]
        %v249 = vld [vmem:[%s1 + $0x18] sm:$0xff]
        %v250 = vld [vmem:[%s240] sm:$0xff]
        %v251 = vld [vmem:[%s240 + $0x8] sm:$0xff]
        %v252 = vld [vmem:[%s240 + $0x10] sm:$0xff]
        %v253 = vld [vmem:[%s240 + $0x18] sm:$0xff]
        %v254 = vld [vmem:[%s240 + $0x20] sm:$0xff]
        %v255 = vld [vmem:[%s240 + $0x28] sm:$0xff]
        %v256 = vld [vmem:[%s240 + $0x30] sm:$0xff]
        %v257 = vld [vmem:[%s240 + $0x38] sm:$0xff]
        %v258 = vld [vmem:[%s240 + $0x40] sm:$0xff]
        %v259 = vld [vmem:[%s240 + $0x48] sm:$0xff]
        %v260 = vld [vmem:[%s240 + $0x50] sm:$0xff]
        %v261 = vld [vmem:[%s240 + $0x58] sm:$0xff]
        %v262 = vld [vmem:[%s240 + $0x60] sm:$0xff]
        %v263 = vld [vmem:[%s240 + $0x68] sm:$0xff]
        %v264 = vld [vmem:[%s240 + $0x70] sm:$0xff]
        %v265 = vld [vmem:[%s240 + $0x78] sm:$0xff]
        %v266 = vld [vmem:[%s2] sm:$0xff]
        %v267 = vld [vmem:[%s2 + $0x8] sm:$0xff]
        %v268 = vld [vmem:[%s2 + $0x10] sm:$0xff]
        %v269 = vld [vmem:[%s2 + $0x18] sm:$0xff]
        %271 = vset.pattern.permute.xlu0 0
        %272 = vperm.xlu0 %271, %v266
        %v273 = vpop.permute.xlu0 %272
        %276 = vset.pattern.permute.xlu0 0
        %277 = vperm.xlu0 %276, %v267
        %v278 = vpop.permute.xlu0 %277
        %281 = vset.pattern.permute.xlu0 0
        %282 = vperm.xlu0 %281, %v268
        %v283 = vpop.permute.xlu0 %282
        %286 = vset.pattern.permute.xlu0 0
        %287 = vperm.xlu0 %286, %v269
        %v288 = vpop.permute.xlu0 %287
        %vm290 = vcmask 261120
        %v292 = vsel %vm290, %v246, 0
        %v295 = vsel %vm290, %v247, 0
        %v298 = vsel %vm290, %v248, 0
        %v301 = vsel %vm290, %v249, 0
        %v304 = vsel %vm290, %v250, 0
        %v307 = vsel %vm290, %v251, 0
        %v310 = vsel %vm290, %v252, 0
        %v313 = vsel %vm290, %v253, 0
        %v316 = vsel %vm290, %v254, 0
        %v319 = vsel %vm290, %v255, 0
        %v322 = vsel %vm290, %v256, 0
        %v325 = vsel %vm290, %v257, 0
        %v328 = vsel %vm290, %v258, 0
        %v331 = vsel %vm290, %v259, 0
        %v334 = vsel %vm290, %v260, 0
        %v337 = vsel %vm290, %v261, 0
        %v340 = vsel %vm290, %v262, 0
        %v343 = vsel %vm290, %v263, 0
        %v346 = vsel %vm290, %v264, 0
        %v349 = vsel %vm290, %v265, 0
        %351 = vmatpush.xpose.msra.mxu0 %v349
        %352 = vmatpush.xpose.msra.mxu0 %v346
        %353 = vmatpush.xpose.msra.mxu0 %v343
        %354 = vmatpush.xpose.msra.mxu0 %v340
        %355 = vmatpush.xpose.msra.mxu0 %v337
        %356 = vmatpush.xpose.msra.mxu0 %v334
        %357 = vmatpush.xpose.msra.mxu0 %v331
        %358 = vmatpush.xpose.msra.mxu0 %v328
        %359 = vmatpush.xpose.msra.mxu0 %v325
        %360 = vmatpush.xpose.msra.mxu0 %v322
        %361 = vmatpush.xpose.msra.mxu0 %v319
        %362 = vmatpush.xpose.msra.mxu0 %v316
        %363 = vmatpush.xpose.msra.mxu0 %v313
        %364 = vmatpush.xpose.msra.mxu0 %v310
        %365 = vmatpush.xpose.msra.mxu0 %v307
        %366 = vmatpush.xpose.msra.mxu0 %v304
        %367 = vmatmul.f32.gmra.mxu0 %v292
        %v368 = vpop.f32.mrf.mxu0
        %v369 = vadd.f32 %v273, %v368
        %370 = vmatmul.f32.gmra.mxu0 %v295
        %v371 = vpop.f32.mrf.mxu0
        %v372 = vadd.f32 %v278, %v371
        %373 = vmatmul.f32.gmra.mxu0 %v298
        %v374 = vpop.f32.mrf.mxu0
        %v375 = vadd.f32 %v283, %v374
        %376 = vmatmul.f32.gmra.mxu0 %v301
        %v377 = vpop.f32.mrf.mxu0
        %v378 = vadd.f32 %v288, %v377
        %379 = vdwg.mxu0
        %v380 = vmax.f32 %v369, 0.0
        %v381 = vmax.f32 %v372, 0.0
        %v382 = vmax.f32 %v375, 0.0
        %v383 = vmax.f32 %v378, 0.0
        %v384 = vld [vmem:[%s3] sm:$0xff]
        %v385 = vld [vmem:[%s3 + $0x8] sm:$0xff]
        %v386 = vld [vmem:[%s3 + $0x10] sm:$0xff]
        %v387 = vld [vmem:[%s3 + $0x18] sm:$0xff]
        %389 = vset.pattern.permute.xlu0 0
        %390 = vperm.xlu0 %389, %v384
        %v391 = vpop.permute.xlu0 %390
        %394 = vset.pattern.permute.xlu0 0
        %395 = vperm.xlu0 %394, %v385
        %v396 = vpop.permute.xlu0 %395
        %399 = vset.pattern.permute.xlu0 0
        %400 = vperm.xlu0 %399, %v386
        %v401 = vpop.permute.xlu0 %400
        %404 = vset.pattern.permute.xlu0 0
        %405 = vperm.xlu0 %404, %v387
        %v406 = vpop.permute.xlu0 %405
        %v408 = vmul.f32 %v380, %v391
        %v409 = vmul.f32 %v381, %v396
        %v410 = vmul.f32 %v382, %v401
        %v411 = vmul.f32 %v383, %v406
        %v412 = vadd.f32 %v408, %v409
        %v413 = vadd.f32 %v412, %v410
        %v414 = vadd.f32 %v413, %v411
        %v415 = vrot.slane %v414, 4
        %v416 = vadd.f32 %v414, %v415
        %v417 = vrot.slane %v416, 2
        %v418 = vadd.f32 %v416, %v417
        %v419 = vrot.slane %v418, 1
        %v420 = vadd.f32 %v418, %v419
        %v421 = vld [vmem:[#allocation2] sm:$0x1]
        %423 = vset.pattern.permute.xlu0 0
        %424 = vperm.xlu0 %423, %v421
        %v425 = vpop.permute.xlu0 %424
        %v427 = vperm.slane %v425, 0
        %v428 = vadd.f32 %v420, %v427
        %v429 = vmin.f32 %v428, 20.0
        %v430 = vmul.f32 %v429, 1.442695
        %v431 = vpow.pop %v430
        %v432 = vadd.f32 %v431, 1.0
        %v433 = vlog2.pop %v432
        %v434 = vmul.f32 %v433, 0.6931472
        %v435 = vmul.f32 -0.5, %v431
        %v436 = vadd.f32 %v435, 1.0
        %v437 = vmul.f32 %v436, %v431
        %v438 = vand.u32 2147483647, %v431
        %vm439 = vcmp.lt.f32.partialorder %v438, 0.0004427343
        %v440 = vsel %vm439, %v437, %v434
        %vm441 = vcmp.gt.f32.partialorder %v428, 20.0
        %v442 = vsel %vm441, %v428, %v440
        %443 = vst [vmem:[%s231] sm:$0x1] %v442
        %s444 = sand.u32 %s139, 1
        %s445 = scalar_lea.sflag [#allocation4], %s444
        %s446 = sand.u32 %s139, 1
        %s447 = scalar_lea.vmem [#allocation3], %s446
        // Predicated region
        $region41: #{tpu_custom_call.1} parent=39 // pred_check
          %p448 = pneg %p149
        $region42: #{tpu_custom_call.1} parent=39 // pred_check_branch
          %450 = sbr.rel (%p448) target = $region44
        $region43: #{tpu_custom_call.1} parent=39 // pred_region
          %452 = vsyncadd %s445, 0
          %s453 = scalar_lea.hbm %s5, %s21
          %s455 = sshll.u32 %s447, 4
          %s456 = int_to_ptr.vmem [resolvable:$true] %s455
          %s457 = sshll.u32 %s453, 4
          %s458 = int_to_ptr.hbm [resolvable:$true] %s457
          %460 = dma.vmem_to_hbm [thread:$0]  %s456, 16, %s458, %s445
        $region44: #{tpu_custom_call.1} parent=39 // pred_fallthru
          _
      $region40: #{tpu_custom_call.1} parent=5 // pred_fallthru
        _
      %p461 = scmp.le.s32.totalorder 2, %s16
      // Predicated region
      $region45: #{tpu_custom_call.1} parent=5 // pred_check
        %p462 = pneg %p461
      $region46: #{tpu_custom_call.1} parent=5 // pred_check_branch
        %464 = sbr.rel (%p462) target = $region48
      $region47: #{tpu_custom_call.1} parent=5 // pred_region
        %s465 = ssub.s32 %s16, 2
        // Predicated region
        $region49: #{tpu_custom_call.1} parent=47 // pred_check
          %p466 = pneg %p155
        $region50: #{tpu_custom_call.1} parent=47 // pred_check_branch
          %468 = sbr.rel (%p466) target = $region52
        $region51: #{tpu_custom_call.1} parent=47 // pred_region
          %s469 = sand.u32 %s140, 1
          %s470 = scalar_lea.sflag [#allocation4], %s469
          %s471 = sand.u32 %s140, 1
          %s472 = scalar_lea.vmem [#allocation3], %s471
          %474 = dma.done %s470, 16
        $region52: #{tpu_custom_call.1} parent=47 // pred_fallthru
          _
      $region48: #{tpu_custom_call.1} parent=5 // pred_fallthru
        _
    $region6: #{tpu_custom_call.1} parent=1 // loop_footer
      %s20 = sadd.s32 1, %s16
    $region7: #{tpu_custom_call.1} parent=1 // loop_footer_branch
      %15 = sbr.rel target = $region3
    $region8: #{tpu_custom_call.1} parent=1 // loop_exit
      _
    %475 = vsyncpa [#allocation4], 1
    %s476 = scalar_lea.sflag [#allocation4], 1
    %477 = vsyncpa %s476, 1

</llo_original>
